<compile_context>
chip_gen: v7x
topology: tpu7x:2x2x1
jax: 0.10.0
libtpu: 0.0.40
codegen_flags: <defaults>
</compile_context>

<pallas_src>
import functools

import jax
import jax.numpy as jnp
from jax.experimental import pallas as pl
from jax.experimental.pallas import tpu as pltpu


# ---------------------------------------------------------------------------
# Weight folding
# ---------------------------------------------------------------------------

def _fuse_attention_weights(w, b, wa, ba):
    """Fold attention Linear(2*out, 1) into the mlp weights.

    cat(x_new[row], x_new[col]) puts SOURCE features first, TARGET features
    last (PyG default flow: row = edge_index[0] = source j, col = target i),
    so ws = wa[:out] acts on x_new[source], wd = wa[out:] on x_new[target].
    One MXU pass then yields [h_new | a_src | a_dst + b_attn].
    """
    out = w.shape[1]
    ws, wd = wa[:out], wa[out:]
    wf = jnp.concatenate([w, w @ ws, w @ wd], axis=1)        # [in, out+2]
    bf = jnp.concatenate([b, b @ ws, b @ wd + ba], axis=1)   # [1,  out+2]
    return wf, bf


# ---------------------------------------------------------------------------
# Fused fast path (whole graph resident in VMEM, one pallas_call)
# ---------------------------------------------------------------------------

def _fused_kernel(x_ref, a_ref, wf1_ref, bf1_ref, wf2_ref, bf2_ref, out_ref,
                  *, H, C):
    a = a_ref[...].astype(jnp.float32)                       # int8 0/1 -> f32, exact
    deg = jnp.maximum(jnp.sum(a, axis=1, keepdims=True), 1.0)
    inv_deg = 1.0 / deg                                      # exact (review concern)

    # ---- layer 1: fused transform + attention-weighted mean aggregation ----
    hf = jnp.dot(x_ref[...], wf1_ref[...],
                 preferred_element_type=jnp.float32) + bf1_ref[...]
    h, a_src, adstb = hf[:, :H], hf[:, H:H + 1], hf[:, H + 1:H + 2]
    agg_h = jnp.dot(a, h, preferred_element_type=jnp.float32)
    agg_s = jnp.dot(a, a_src * h, preferred_element_type=jnp.float32)
    h1 = jnp.maximum((adstb * agg_h + agg_s) * inv_deg, 0.0)  # F.relu
    # F.dropout: identity in eval mode.
    # TODO(synk): training-mode dropout (random mask) not implemented.

    # ---- layer 2 ----
    hf2 = jnp.dot(h1, wf2_ref[...],
                  preferred_element_type=jnp.float32) + bf2_ref[...]
    h2, a_src2, adstb2 = hf2[:, :C], hf2[:, C:C + 1], hf2[:, C + 1:C + 2]
    agg_h2 = jnp.dot(a, h2, preferred_element_type=jnp.float32)
    agg_s2 = jnp.dot(a, a_src2 * h2, preferred_element_type=jnp.float32)
    o = (adstb2 * agg_h2 + agg_s2) * inv_deg

    # ---- log_softmax ----
    m = jnp.max(o, axis=1, keepdims=True)
    z = o - m
    lse = jnp.log(jnp.sum(jnp.exp(z), axis=1, keepdims=True))
    out_ref[...] = z - lse


# ---------------------------------------------------------------------------
# Streamed path kernels (row-tiled over targets, A streamed as int8)
# ---------------------------------------------------------------------------

def _transform_kernel(x_ref, wf_ref, bf_ref, msg_ref, *, out_ch):
    """hf = x @ [W|W@ws|W@wd] + bf.  msg layout: [h | a_src*h | 1 | adstb]."""
    hf = jnp.dot(x_ref[...], wf_ref[...],
                 preferred_element_type=jnp.float32) + bf_ref[...]
    h = hf[:, :out_ch]
    a_src = hf[:, out_ch:out_ch + 1]
    adstb = hf[:, out_ch + 1:out_ch + 2]
    # Direct slice-stores (no in-kernel concatenate temp).
    msg_ref[:, :out_ch] = h
    msg_ref[:, out_ch:2 * out_ch] = a_src * h
    msg_ref[:, 2 * out_ch:2 * out_ch + 1] = jnp.ones_like(a_src)   # deg column
    msg_ref[:, 2 * out_ch + 1:] = adstb


def _agg_relu_transform_kernel(a_ref, msg_ref, wf_ref, bf_ref, msg_out_ref,
                               *, out_ch, next_out_ch, tile):
    """Layer-1 mean-aggregation + ReLU, fused with the layer-2 transform.

    msg_out layout: [h2 | a_src2*h2 | adstb2 | inv_deg]  (inv_deg reused in L2).
    """
    a = a_ref[...].astype(jnp.float32)                       # int8 -> f32 in-kernel
    agg = jnp.dot(a, msg_ref[...], preferred_element_type=jnp.float32)
    left = agg[:, :out_ch]                                   # A @ h
    right = agg[:, out_ch:2 * out_ch]                        # A @ (a_src*h)
    deg = jnp.maximum(agg[:, 2 * out_ch:2 * out_ch + 1], 1.0)  # A @ 1 (guard pads)
    inv_deg = 1.0 / deg

    # adstb for THIS tile's targets comes from the resident msg block.
    row0 = pl.multiple_of(pl.program_id(0) * tile, tile)
    tgt = msg_ref[pl.ds(row0, tile), :]
    adstb = tgt[:, 2 * out_ch + 1:2 * out_ch + 2]

    h = jnp.maximum((adstb * left + right) * inv_deg, 0.0)   # F.relu
    # F.dropout: identity in eval mode (see TODO above).

    hf = jnp.dot(h, wf_ref[...],
                 preferred_element_type=jnp.float32) + bf_ref[...]
    h2 = hf[:, :next_out_ch]
    a_src2 = hf[:, next_out_ch:next_out_ch + 1]
    adstb2 = hf[:, next_out_ch + 1:next_out_ch + 2]
    msg_out_ref[:, :next_out_ch] = h2
    msg_out_ref[:, next_out_ch:2 * next_out_ch] = a_src2 * h2
    msg_out_ref[:, 2 * next_out_ch:2 * next_out_ch + 1] = adstb2
    msg_out_ref[:, 2 * next_out_ch + 1:] = inv_deg


def _agg_logsoftmax_kernel(a_ref, msg_ref, out_ref, *, out_ch, tile):
    """Layer-2 mean-aggregation fused with row-wise log_softmax."""
    a = a_ref[...].astype(jnp.float32)
    agg = jnp.dot(a, msg_ref[...], preferred_element_type=jnp.float32)
    left = agg[:, :out_ch]
    right = agg[:, out_ch:2 * out_ch]

    row0 = pl.multiple_of(pl.program_id(0) * tile, tile)
    tgt = msg_ref[pl.ds(row0, tile), :]
    adstb = tgt[:, 2 * out_ch:2 * out_ch + 1]
    inv_deg = tgt[:, 2 * out_ch + 1:2 * out_ch + 2]          # computed in layer 1

    h = (adstb * left + right) * inv_deg
    m = jnp.max(h, axis=1, keepdims=True)
    z = h - m
    lse = jnp.log(jnp.sum(jnp.exp(z), axis=1, keepdims=True))
    # NOTE: only C (<128) lanes -> masked partial store; batch graphs along the
    # lane axis to make this lane-dense.
    out_ref[...] = z - lse


# ---------------------------------------------------------------------------
# Tiling / VMEM-budget helpers
# ---------------------------------------------------------------------------

def _round_up(n, m):
    return ((n + m - 1) // m) * m


def _vmem_capacity_bytes():
    try:
        info = pltpu.get_tpu_info()
        for name in ("vmem_capacity_bytes", "vmem_size_bytes", "vmem_bytes"):
            v = getattr(info, name, None)
            if v:
                return int(v)
    except Exception:
        pass
    return 64 * 1024 * 1024   # conservative default (v7x per-TensorCore VMEM)


def _choose_tiling(n, f, h, c, budget):
    """Largest fixed row tile (targets per grid step) that fits the VMEM budget
    while keeping >=2 (ideally >=4) grid steps for megacore / pipelining."""
    msg_w = max(2 * h + 2, 2 * c + 2)
    for min_steps in (4, 2, 1):
        for tile in (1024, 512, 256, 128, 64, 32):   # multiples of 32 (int8 sublanes)
            n_pad = _round_up(n, tile)
            if n_pad // tile < min_steps:
                continue
            need = (2 * tile * n_pad                  # int8 A row tile, double-buffered
                    + 4 * tile * n_pad                # in-kernel f32 upcast of the tile
                    + 8 * n_pad * msg_w               # resident f32 msg block (x2 slack)
                    + 8 * tile * max(msg_w, f, c))    # in/out row tiles + slack
            if need <= budget:
                return tile, n_pad
    # TODO(synk): K-tile the aggregation (second 'arbitrary' grid axis over
    # source chunks + f32 accumulator scratch) for graphs whose resident msg
    # block no longer fits VMEM.
    return 32, _round_up(n, 32)


# ---------------------------------------------------------------------------
# Forward pass
# ---------------------------------------------------------------------------

def net_forward(x, A, params, *, force_streamed=False):
    N, F = x.shape
    H = params["w1"].shape[1]
    C = params["w2"].shape[1]

    wf1, bf1 = _fuse_attention_weights(params["w1"], params["b1"],
                                       params["wa1"], params["ba1"])
    wf2, bf2 = _fuse_attention_weights(params["w2"], params["b2"],
                                       params["wa2"], params["ba2"])

    vmem_cap = _vmem_capacity_bytes()
    # ~48 MiB scoped limit on v7x (64 MiB VMEM), ~96 MiB on v5e/v6e (128 MiB).
    vmem_limit = max(32 * 1024 * 1024, int(vmem_cap * 0.75))
    budget = int(vmem_limit * 0.85)

    # ---------------- fused fast path (A + intermediates resident) ----------
    n32 = _round_up(N, 32)
    fused_bytes = (n32 * n32 * (1 + 4)                       # int8 A + f32 upcast
                   + 8 * n32 * (F + 2 * H + 2 * C + 16))     # x, hf, msgs, out
    if (not force_streamed) and fused_bytes <= budget:
        x_p = jnp.pad(x, ((0, n32 - N), (0, 0)))
        A_i8 = jnp.pad(A, ((0, n32 - N), (0, n32 - N))).astype(jnp.int8)
        out = pl.pallas_call(
            functools.partial(_fused_kernel, H=H, C=C),
            out_shape=jax.ShapeDtypeStruct((n32, C), jnp.float32),
            compiler_params=pltpu.CompilerParams(vmem_limit_bytes=vmem_limit),
        )(x_p, A_i8, wf1, bf1, wf2, bf2)
        return out[:N]

    # ---------------- streamed, row-tiled path ------------------------------
    tile, n_pad = _choose_tiling(N, F, H, C, budget)
    x_p = jnp.pad(x, ((0, n_pad - N), (0, 0)))
    A_i8 = jnp.pad(A, ((0, n_pad - N), (0, n_pad - N))).astype(jnp.int8)

    grid = (n_pad // tile,)
    cparams = pltpu.CompilerParams(
        dimension_semantics=("parallel",),
        vmem_limit_bytes=vmem_limit,
    )

    W1 = 2 * H + 2   # [h | a_src*h | 1 | adstb]
    W2 = 2 * C + 2   # [h2 | a_src2*h2 | adstb2 | inv_deg]

    # Call 1: layer-1 fused transform (node-row tiled).
    msg1 = pl.pallas_call(
        functools.partial(_transform_kernel, out_ch=H),
        grid=grid,
        in_specs=[
            pl.BlockSpec((tile, F), lambda i: (i, 0)),
            pl.BlockSpec((F, H + 2), lambda i: (0, 0)),
            pl.BlockSpec((1, H + 2), lambda i: (0, 0)),
        ],
        out_specs=pl.BlockSpec((tile, W1), lambda i: (i, 0)),
        out_shape=jax.ShapeDtypeStruct((n_pad, W1), jnp.float32),
        compiler_params=cparams,
    )(x_p, wf1, bf1)

    # Call 2: layer-1 aggregation + ReLU + layer-2 transform (A row-tiled,
    # int8 A streamed & double-buffered; msg1 resident).
    msg2 = pl.pallas_call(
        functools.partial(_agg_relu_transform_kernel,
                          out_ch=H, next_out_ch=C, tile=tile),
        grid=grid,
        in_specs=[
            pl.BlockSpec((tile, n_pad), lambda i: (i, 0)),     # int8 A row tile
            pl.BlockSpec((n_pad, W1), lambda i: (0, 0)),       # msg1 resident
            pl.BlockSpec((H, C + 2), lambda i: (0, 0)),
            pl.BlockSpec((1, C + 2), lambda i: (0, 0)),
        ],
        out_specs=pl.BlockSpec((tile, W2), lambda i: (i, 0)),
        out_shape=jax.ShapeDtypeStruct((n_pad, W2), jnp.float32),
        compiler_params=cparams,
    )(A_i8, msg1, wf2, bf2)

    # Call 3: layer-2 aggregation + log_softmax.
    out = pl.pallas_call(
        functools.partial(_agg_logsoftmax_kernel, out_ch=C, tile=tile),
        grid=grid,
        in_specs=[
            pl.BlockSpec((tile, n_pad), lambda i: (i, 0)),
            pl.BlockSpec((n_pad, W2), lambda i: (0, 0)),
        ],
        out_specs=pl.BlockSpec((tile, C), lambda i: (i, 0)),
        out_shape=jax.ShapeDtypeStruct((n_pad, C), jnp.float32),
        compiler_params=cparams,
    )(A_i8, msg2)

    return out[:N]


# ---------------------------------------------------------------------------
# Pure-JAX dense reference (for validation)
# ---------------------------------------------------------------------------

def net_reference(x, A, params):
    def layer(h, w, b, wa, ba):
        h_new = h @ w + b
        out = w.shape[1]
        ws, wd = wa[:out], wa[out:]
        a_src = h_new @ ws                       # per source j
        a_dst = h_new @ wd                       # per target i
        deg = jnp.maximum(A.sum(axis=1, keepdims=True), 1.0)
        scores = a_src.T + a_dst + ba            # scores[i, j]
        return ((A * scores) @ h_new) / deg      # mean aggregation
    h1 = jax.nn.relu(layer(x, params["w1"], params["b1"],
                           params["wa1"], params["ba1"]))
    h2 = layer(h1, params["w2"], params["b2"], params["wa2"], params["ba2"])
    return jax.nn.log_softmax(h2, axis=1)


# ---------------------------------------------------------------------------
# Demo
# ---------------------------------------------------------------------------

if __name__ == "__main__":
    N = 40        # number of nodes
    F_IN = 16     # dataset.num_features
    HID = 16      # conv1 output channels
    C = 8         # dataset.num_classes

    key = jax.random.PRNGKey(0)
    keys = jax.random.split(key, 9)

    x = jax.random.normal(keys[0], (N, F_IN), dtype=jnp.float32)

    # small directed graph (ring + skip edges), no duplicates / no self-loops
    src = jnp.concatenate([jnp.arange(N), jnp.arange(N)])
    dst = jnp.concatenate([(jnp.arange(N) + 1) % N, (jnp.arange(N) + 3) % N])
    A = jnp.zeros((N, N), jnp.float32).at[dst, src].set(1.0)   # A[target, source]
    A = A + jnp.eye(N, dtype=jnp.float32)                      # add_self_loops

    def linear_init(k, fan_in, shape):
        bound = 1.0 / jnp.sqrt(jnp.float32(fan_in))
        return jax.random.uniform(k, shape, jnp.float32, -bound, bound)

    w1 = linear_init(keys[1], F_IN, (F_IN, HID))
    b1 = linear_init(keys[2], F_IN, (1, HID))
    wa1 = linear_init(keys[3], 2 * HID, (2 * HID, 1))
    ba1 = linear_init(keys[4], 2 * HID, (1, 1))
    w2 = linear_init(keys[5], HID, (HID, C))
    b2 = linear_init(keys[6], HID, (1, C))
    wa2 = linear_init(keys[7], 2 * C, (2 * C, 1))
    ba2 = linear_init(keys[8], 2 * C, (1, 1))
    params = dict(w1=w1, b1=b1, wa1=wa1, ba1=ba1,
                  w2=w2, b2=b2, wa2=wa2, ba2=ba2)

    ref = net_reference(x, A, params)

    out_fused = net_forward(x, A, params)                       # fused fast path
    out_tiled = net_forward(x, A, params, force_streamed=True)  # streamed path
    jax.block_until_ready((out_fused, out_tiled))

    assert out_fused.shape == (N, C) and out_tiled.shape == (N, C)
    err_f = float(jnp.max(jnp.abs(out_fused - ref)))
    err_t = float(jnp.max(jnp.abs(out_tiled - ref)))
    assert err_f < 1e-3, f"fused path mismatch: max abs err {err_f}"
    assert err_t < 1e-3, f"streamed path mismatch: max abs err {err_t}"
    print("KERNEL_OK")
</pallas_src>

<mosaic_0001>
module attributes {stable_mosaic.version = 11 : i64} {
  func.func @_fused_kernel(%arg0: memref<64x16xf32, #tpu.memory_space<vmem>>, %arg1: memref<64x64xi8, #tpu.memory_space<vmem>>, %arg2: memref<16x18xf32, #tpu.memory_space<vmem>>, %arg3: memref<1x18xf32, #tpu.memory_space<vmem>>, %arg4: memref<16x10xf32, #tpu.memory_space<vmem>>, %arg5: memref<1x10xf32, #tpu.memory_space<vmem>>, %arg6: memref<64x8xf32, #tpu.memory_space<vmem>>) attributes {dimension_semantics = [], scalar_prefetch = 0 : i64, scratch_operands = 0 : i64, tpu.core_type = #tpu.core_type<tc>} {
    %c0 = arith.constant 0 : index
    %c0_0 = arith.constant 0 : index
    %0 = vector.load %arg1[%c0, %c0_0] : memref<64x64xi8, #tpu.memory_space<vmem>>, vector<64x64xi8>
    %1 = arith.sitofp %0 : vector<64x64xi8> to vector<64x64xf32>
    %cst = arith.constant dense<0.000000e+00> : vector<64xf32>
    %2 = vector.multi_reduction <add>, %1, %cst [1] : vector<64x64xf32> to vector<64xf32>
    %3 = vector.shape_cast %2 : vector<64xf32> to vector<64x1xf32>
    %cst_1 = arith.constant 1.000000e+00 : f32
    %4 = vector.broadcast %cst_1 : f32 to vector<64x1xf32>
    %5 = arith.maximumf %3, %4 : vector<64x1xf32>
    %cst_2 = arith.constant 1.000000e+00 : f32
    %6 = vector.broadcast %cst_2 : f32 to vector<64x1xf32>
    %7 = arith.divf %6, %5 : vector<64x1xf32>
    %c0_3 = arith.constant 0 : index
    %c0_4 = arith.constant 0 : index
    %8 = vector.load %arg0[%c0_3, %c0_4] : memref<64x16xf32, #tpu.memory_space<vmem>>, vector<64x16xf32>
    %c0_5 = arith.constant 0 : index
    %c0_6 = arith.constant 0 : index
    %9 = vector.load %arg2[%c0_5, %c0_6] : memref<16x18xf32, #tpu.memory_space<vmem>>, vector<16x18xf32>
    %cst_7 = arith.constant dense<0.000000e+00> : vector<64x18xf32>
    %10 = tpu.matmul %8, %9, %cst_7 {dimension_numbers = #tpu.dot_dimension_numbers<[1], [0], [0], [1], [0, 0, 1, 1], [], []>} : vector<64x16xf32>, vector<16x18xf32>, vector<64x18xf32> -> vector<64x18xf32>
    %c0_8 = arith.constant 0 : index
    %c0_9 = arith.constant 0 : index
    %11 = vector.load %arg3[%c0_8, %c0_9] : memref<1x18xf32, #tpu.memory_space<vmem>>, vector<1x18xf32>
    %12 = vector.broadcast %11 : vector<1x18xf32> to vector<64x18xf32>
    %13 = arith.addf %10, %12 : vector<64x18xf32>
    %14 = vector.extract_strided_slice %13 {offsets = [0, 0], sizes = [64, 16], strides = [1, 1]} : vector<64x18xf32> to vector<64x16xf32>
    %15 = vector.extract_strided_slice %13 {offsets = [0, 16], sizes = [64, 1], strides = [1, 1]} : vector<64x18xf32> to vector<64x1xf32>
    %16 = vector.extract_strided_slice %13 {offsets = [0, 17], sizes = [64, 1], strides = [1, 1]} : vector<64x18xf32> to vector<64x1xf32>
    %cst_10 = arith.constant dense<0.000000e+00> : vector<64x16xf32>
    %17 = tpu.matmul %1, %14, %cst_10 {dimension_numbers = #tpu.dot_dimension_numbers<[1], [0], [0], [1], [0, 0, 1, 1], [], []>} : vector<64x64xf32>, vector<64x16xf32>, vector<64x16xf32> -> vector<64x16xf32>
    %18 = vector.broadcast %15 : vector<64x1xf32> to vector<64x16xf32>
    %19 = arith.mulf %18, %14 : vector<64x16xf32>
    %cst_11 = arith.constant dense<0.000000e+00> : vector<64x16xf32>
    %20 = tpu.matmul %1, %19, %cst_11 {dimension_numbers = #tpu.dot_dimension_numbers<[1], [0], [0], [1], [0, 0, 1, 1], [], []>} : vector<64x64xf32>, vector<64x16xf32>, vector<64x16xf32> -> vector<64x16xf32>
    %21 = vector.broadcast %16 : vector<64x1xf32> to vector<64x16xf32>
    %22 = arith.mulf %21, %17 : vector<64x16xf32>
    %23 = arith.addf %22, %20 : vector<64x16xf32>
    %24 = vector.broadcast %7 : vector<64x1xf32> to vector<64x16xf32>
    %25 = arith.mulf %23, %24 : vector<64x16xf32>
    %cst_12 = arith.constant 0.000000e+00 : f32
    %26 = vector.broadcast %cst_12 : f32 to vector<64x16xf32>
    %27 = arith.maximumf %25, %26 : vector<64x16xf32>
    %c0_13 = arith.constant 0 : index
    %c0_14 = arith.constant 0 : index
    %28 = vector.load %arg4[%c0_13, %c0_14] : memref<16x10xf32, #tpu.memory_space<vmem>>, vector<16x10xf32>
    %cst_15 = arith.constant dense<0.000000e+00> : vector<64x10xf32>
    %29 = tpu.matmul %27, %28, %cst_15 {dimension_numbers = #tpu.dot_dimension_numbers<[1], [0], [0], [1], [0, 0, 1, 1], [], []>} : vector<64x16xf32>, vector<16x10xf32>, vector<64x10xf32> -> vector<64x10xf32>
    %c0_16 = arith.constant 0 : index
    %c0_17 = arith.constant 0 : index
    %30 = vector.load %arg5[%c0_16, %c0_17] : memref<1x10xf32, #tpu.memory_space<vmem>>, vector<1x10xf32>
    %31 = vector.broadcast %30 : vector<1x10xf32> to vector<64x10xf32>
    %32 = arith.addf %29, %31 : vector<64x10xf32>
    %33 = vector.extract_strided_slice %32 {offsets = [0, 0], sizes = [64, 8], strides = [1, 1]} : vector<64x10xf32> to vector<64x8xf32>
    %34 = vector.extract_strided_slice %32 {offsets = [0, 8], sizes = [64, 1], strides = [1, 1]} : vector<64x10xf32> to vector<64x1xf32>
    %35 = vector.extract_strided_slice %32 {offsets = [0, 9], sizes = [64, 1], strides = [1, 1]} : vector<64x10xf32> to vector<64x1xf32>
    %cst_18 = arith.constant dense<0.000000e+00> : vector<64x8xf32>
    %36 = tpu.matmul %1, %33, %cst_18 {dimension_numbers = #tpu.dot_dimension_numbers<[1], [0], [0], [1], [0, 0, 1, 1], [], []>} : vector<64x64xf32>, vector<64x8xf32>, vector<64x8xf32> -> vector<64x8xf32>
    %37 = vector.broadcast %34 : vector<64x1xf32> to vector<64x8xf32>
    %38 = arith.mulf %37, %33 : vector<64x8xf32>
    %cst_19 = arith.constant dense<0.000000e+00> : vector<64x8xf32>
    %39 = tpu.matmul %1, %38, %cst_19 {dimension_numbers = #tpu.dot_dimension_numbers<[1], [0], [0], [1], [0, 0, 1, 1], [], []>} : vector<64x64xf32>, vector<64x8xf32>, vector<64x8xf32> -> vector<64x8xf32>
    %40 = vector.broadcast %35 : vector<64x1xf32> to vector<64x8xf32>
    %41 = arith.mulf %40, %36 : vector<64x8xf32>
    %42 = arith.addf %41, %39 : vector<64x8xf32>
    %43 = vector.broadcast %7 : vector<64x1xf32> to vector<64x8xf32>
    %44 = arith.mulf %42, %43 : vector<64x8xf32>
    %cst_20 = arith.constant dense<0xFF800000> : vector<64xf32>
    %45 = vector.multi_reduction <maximumf>, %44, %cst_20 [1] : vector<64x8xf32> to vector<64xf32>
    %46 = vector.shape_cast %45 : vector<64xf32> to vector<64x1xf32>
    %47 = vector.broadcast %46 : vector<64x1xf32> to vector<64x8xf32>
    %48 = arith.subf %44, %47 : vector<64x8xf32>
    %49 = math.exp %48 : vector<64x8xf32>
    %cst_21 = arith.constant dense<0.000000e+00> : vector<64xf32>
    %50 = vector.multi_reduction <add>, %49, %cst_21 [1] : vector<64x8xf32> to vector<64xf32>
    %51 = vector.shape_cast %50 : vector<64xf32> to vector<64x1xf32>
    %52 = math.log %51 : vector<64x1xf32>
    %53 = vector.broadcast %52 : vector<64x1xf32> to vector<64x8xf32>
    %54 = arith.subf %48, %53 : vector<64x8xf32>
    %c0_22 = arith.constant 0 : index
    %c0_23 = arith.constant 0 : index
    %55 = vector.load %arg6[%c0_22, %c0_23] : memref<64x8xf32, #tpu.memory_space<vmem>>, vector<64x8xf32>
    tpu.vector_store %arg6[%c0_22, %c0_23], %54 {strides = array<i32>} : memref<64x8xf32, #tpu.memory_space<vmem>>, vector<64x8xf32>,
    return
  }
}

</mosaic_0001>

<llo_original>
// kernel: tpu_custom_call.1
$region0: #{tpu_custom_call.1}
  #allocation0 [shape = 'u32[]', space=smem, size = 0x4, offset = 0x4, fixed_abs, tag = 'smem constant byte address 0x4 - core index']
  #allocation1 [shape = 'u32[144,128]{1,0:T(1,128)}', space=vmem, size = 0x12000, scoped, tag = 'internal scratch']
  %s0 = inlined_call_operand.vmem [shape: f32[64,16], index: 0, kind: input, shape index: {}]
  %s1 = inlined_call_operand.vmem [shape: s8[64,64], index: 1, kind: input, shape index: {}]
  %s2 = inlined_call_operand.vmem [shape: f32[16,18], index: 2, kind: input, shape index: {}]
  %s3 = inlined_call_operand.vmem [shape: f32[1,18], index: 3, kind: input, shape index: {}]
  %s4 = inlined_call_operand.vmem [shape: f32[16,10], index: 4, kind: input, shape index: {}]
  %s5 = inlined_call_operand.vmem [shape: f32[1,10], index: 5, kind: input, shape index: {}]
  %s6 = inlined_call_operand.vmem [shape: f32[64,8], index: 6, kind: output, shape index: {}]
  %s7 = sld [smem:[#allocation0]]
  $region34: #{tpu_custom_call.1} parent=0
    _
  %s9 = ssub.s32 1, %s7
  %s10 = scalar_select 0, %s9, %s7
  // Predicated region
  $region2: #{tpu_custom_call.1} parent=0 // pred_check
    _
  $region3: #{tpu_custom_call.1} parent=0 // pred_check_branch
    %12 = sbr.rel (0) target = $region5
  $region4: #{tpu_custom_call.1} parent=0 // pred_region
    _
  $region5: #{tpu_custom_call.1} parent=0 // pred_fallthru
    _
  // Predicated region
  $region6: #{tpu_custom_call.1} parent=0 // pred_check
    _
  $region7: #{tpu_custom_call.1} parent=0 // pred_check_branch
    %14 = sbr.rel (0) target = $region9
  $region8: #{tpu_custom_call.1} parent=0 // pred_region
    _
  $region9: #{tpu_custom_call.1} parent=0 // pred_fallthru
    _
  // Predicated region
  $region10: #{tpu_custom_call.1} parent=0 // pred_check
    _
  $region11: #{tpu_custom_call.1} parent=0 // pred_check_branch
    %16 = sbr.rel (0) target = $region13
  $region12: #{tpu_custom_call.1} parent=0 // pred_region
    _
  $region13: #{tpu_custom_call.1} parent=0 // pred_fallthru
    _
  // Predicated region
  $region14: #{tpu_custom_call.1} parent=0 // pred_check
    _
  $region15: #{tpu_custom_call.1} parent=0 // pred_check_branch
    %18 = sbr.rel (0) target = $region17
  $region16: #{tpu_custom_call.1} parent=0 // pred_region
    _
  $region17: #{tpu_custom_call.1} parent=0 // pred_fallthru
    _
  // Predicated region
  $region18: #{tpu_custom_call.1} parent=0 // pred_check
    _
  $region19: #{tpu_custom_call.1} parent=0 // pred_check_branch
    %20 = sbr.rel (0) target = $region21
  $region20: #{tpu_custom_call.1} parent=0 // pred_region
    _
  $region21: #{tpu_custom_call.1} parent=0 // pred_fallthru
    _
  // Predicated region
  $region22: #{tpu_custom_call.1} parent=0 // pred_check
    _
  $region23: #{tpu_custom_call.1} parent=0 // pred_check_branch
    %22 = sbr.rel (0) target = $region25
  $region24: #{tpu_custom_call.1} parent=0 // pred_region
    _
  $region25: #{tpu_custom_call.1} parent=0 // pred_fallthru
    _
  %v23 = vld [vmem:[%s1] sm:$0xff]
  %v24 = vld [vmem:[%s1 + $0x8] sm:$0xff]
  %v25 = vunpack.c.0.s8 %v23
  %v26 = vunpack.c.1.s8 %v23
  %v27 = vunpack.c.2.s8 %v23
  %v28 = vunpack.c.3.s8 %v23
  %v29 = vunpack.c.0.s8 %v24
  %v30 = vunpack.c.1.s8 %v24
  %v31 = vunpack.c.2.s8 %v24
  %v32 = vunpack.c.3.s8 %v24
  %v33 = vcvt.s32.f32 %v25
  %v34 = vcvt.s32.f32 %v26
  %v35 = vcvt.s32.f32 %v27
  %v36 = vcvt.s32.f32 %v28
  %v37 = vcvt.s32.f32 %v29
  %v38 = vcvt.s32.f32 %v30
  %v39 = vcvt.s32.f32 %v31
  %v40 = vcvt.s32.f32 %v32
  %vm41 = vcmask 523264
  %v42 = vsel %vm41, %v33, 0.0
  %43 = vadd.xlane.f32.xlu0 %v42
  %v44 = vpop.xlane.xlu0 %43
  %v45 = vsel %vm41, %v34, 0.0
  %46 = vadd.xlane.f32.xlu0 %v45
  %v47 = vpop.xlane.xlu0 %46
  %v48 = vsel %vm41, %v35, 0.0
  %49 = vadd.xlane.f32.xlu0 %v48
  %v50 = vpop.xlane.xlu0 %49
  %v51 = vsel %vm41, %v36, 0.0
  %52 = vadd.xlane.f32.xlu0 %v51
  %v53 = vpop.xlane.xlu0 %52
  %v54 = vsel %vm41, %v37, 0.0
  %55 = vadd.xlane.f32.xlu0 %v54
  %v56 = vpop.xlane.xlu0 %55
  %v57 = vsel %vm41, %v38, 0.0
  %58 = vadd.xlane.f32.xlu0 %v57
  %v59 = vpop.xlane.xlu0 %58
  %v60 = vsel %vm41, %v39, 0.0
  %61 = vadd.xlane.f32.xlu0 %v60
  %v62 = vpop.xlane.xlu0 %61
  %v63 = vsel %vm41, %v40, 0.0
  %64 = vadd.xlane.f32.xlu0 %v63
  %v65 = vpop.xlane.xlu0 %64
  %v66 = vmax.f32 %v44, 1.0
  %v67 = vmax.f32 %v47, 1.0
  %v68 = vmax.f32 %v50, 1.0
  %v69 = vmax.f32 %v53, 1.0
  %v70 = vmax.f32 %v56, 1.0
  %v71 = vmax.f32 %v59, 1.0
  %v72 = vmax.f32 %v62, 1.0
  %v73 = vmax.f32 %v65, 1.0
  %v74 = vrcp.pop %v66
  %v75 = vmul.f32 1.0, %v74
  %v76 = vrcp.pop %v67
  %v77 = vmul.f32 1.0, %v76
  %v78 = vrcp.pop %v68
  %v79 = vmul.f32 1.0, %v78
  %v80 = vrcp.pop %v69
  %v81 = vmul.f32 1.0, %v80
  %v82 = vrcp.pop %v70
  %v83 = vmul.f32 1.0, %v82
  %v84 = vrcp.pop %v71
  %v85 = vmul.f32 1.0, %v84
  %v86 = vrcp.pop %v72
  %v87 = vmul.f32 1.0, %v86
  %v88 = vrcp.pop %v73
  %v89 = vmul.f32 1.0, %v88
  %v90 = vld [vmem:[%s0] sm:$0xff]
  %v91 = vld [vmem:[%s0 + $0x8] sm:$0xff]
  %v92 = vld [vmem:[%s0 + $0x10] sm:$0xff]
  %v93 = vld [vmem:[%s0 + $0x18] sm:$0xff]
  %v94 = vld [vmem:[%s0 + $0x20] sm:$0xff]
  %v95 = vld [vmem:[%s0 + $0x28] sm:$0xff]
  %v96 = vld [vmem:[%s0 + $0x30] sm:$0xff]
  %v97 = vld [vmem:[%s0 + $0x38] sm:$0xff]
  %v98 = vld [vmem:[%s2] sm:$0xff]
  %v99 = vld [vmem:[%s2 + $0x8] sm:$0xff]
  %v100 = vld [vmem:[%s3] sm:$0x1]
  %v102 = vlaneseq
  %v103 = vshrl.u32 %v102, 7
  %v104 = vsub.s32 0, %v103
  %v105 = vrot.slane %v100, %v104
  %vm107 = vcmask 130048
  %v109 = vsel %vm107, %v90, 0
  %v112 = vsel %vm107, %v91, 0
  %v115 = vsel %vm107, %v92, 0
  %v118 = vsel %vm107, %v93, 0
  %v121 = vsel %vm107, %v94, 0
  %v124 = vsel %vm107, %v95, 0
  %v127 = vsel %vm107, %v96, 0
  %v130 = vsel %vm107, %v97, 0
  %132 = vmatprep.subr.mxu0 0.0
  %133 = vmatpush1.msra.mxu0 %v98
  %134 = vmatprep.subr.mxu0 0.0
  %135 = vmatpush1.msra.mxu0 %v99
  %136 = vmatprep.subr.mxu0 0.0
  %137 = vmatpush1.msra.mxu0 0.0
  %138 = vmatprep.subr.mxu0 0.0
  %139 = vmatpush1.msra.mxu0 0.0
  %140 = vmatprep.subr.mxu0 0.0
  %141 = vmatpush1.msra.mxu0 0.0
  %142 = vmatprep.subr.mxu0 0.0
  %143 = vmatpush1.msra.mxu0 0.0
  %144 = vmatprep.subr.mxu0 0.0
  %145 = vmatpush1.msra.mxu0 0.0
  %146 = vmatprep.subr.mxu0 0.0
  %147 = vmatpush1.msra.mxu0 0.0
  %148 = vmatprep.subr.mxu0 0.0
  %149 = vmatpush1.msra.mxu0 0.0
  %150 = vmatprep.subr.mxu0 0.0
  %151 = vmatpush1.msra.mxu0 0.0
  %152 = vmatprep.subr.mxu0 0.0
  %153 = vmatpush1.msra.mxu0 0.0
  %154 = vmatprep.subr.mxu0 0.0
  %155 = vmatpush1.msra.mxu0 0.0
  %156 = vmatprep.subr.mxu0 0.0
  %157 = vmatpush1.msra.mxu0 0.0
  %158 = vmatprep.subr.mxu0 0.0
  %159 = vmatpush1.msra.mxu0 0.0
  %160 = vmatprep.subr.mxu0 0.0
  %161 = vmatpush1.msra.mxu0 0.0
  %162 = vmatprep.subr.mxu0 0.0
  %163 = vmatpush1.msra.mxu0 0.0
  %164 = vmatprep.subr.mxu0 0.0
  %165 = vmatpush1.msra.mxu0 0.0
  %166 = vmatprep.subr.mxu0 0.0
  %167 = vmatpush1.msra.mxu0 0.0
  %168 = vmatprep.subr.mxu0 0.0
  %169 = vmatpush1.msra.mxu0 0.0
  %170 = vmatprep.subr.mxu0 0.0
  %171 = vmatpush1.msra.mxu0 0.0
  %172 = vmatprep.subr.mxu0 0.0
  %173 = vmatpush1.msra.mxu0 0.0
  %174 = vmatprep.subr.mxu0 0.0
  %175 = vmatpush1.msra.mxu0 0.0
  %176 = vmatprep.subr.mxu0 0.0
  %177 = vmatpush1.msra.mxu0 0.0
  %178 = vmatprep.subr.mxu0 0.0
  %179 = vmatpush1.msra.mxu0 0.0
  %180 = vmatprep.subr.mxu0 0.0
  %181 = vmatpush1.msra.mxu0 0.0
  %182 = vmatprep.subr.mxu0 0.0
  %183 = vmatpush1.msra.mxu0 0.0
  %184 = vmatprep.subr.mxu0 0.0
  %185 = vmatpush1.msra.mxu0 0.0
  %186 = vmatprep.subr.mxu0 0.0
  %187 = vmatpush1.msra.mxu0 0.0
  %188 = vmatprep.subr.mxu0 0.0
  %189 = vmatpush1.msra.mxu0 0.0
  %190 = vmatprep.subr.mxu0 0.0
  %191 = vmatpush1.msra.mxu0 0.0
  %192 = vmatprep.subr.mxu0 0.0
  %193 = vmatpush1.msra.mxu0 0.0
  %194 = vmatprep.subr.mxu0 0.0
  %195 = vmatpush1.msra.mxu0 0.0
  %196 = vmatprep.mubr.f32.mxu0 0.0
  %197 = vmatmul.mubr.f32.gmra.mrb[0].mxu0 %v109
  %v198 = vpop.f32.mrb[0].mxu0
  %v199 = vadd.f32 %v105, %v198
  %v200 = vpop.f32.mrb[0].mxu0
  %201 = vmatprep.mubr.f32.mxu0 0.0
  %202 = vmatmul.mubr.f32.gmra.mrb[0].mxu0 %v112
  %v203 = vpop.f32.mrb[0].mxu0
  %v204 = vadd.f32 %v105, %v203
  %v205 = vpop.f32.mrb[0].mxu0
  %206 = vmatprep.mubr.f32.mxu0 0.0
  %207 = vmatmul.mubr.f32.gmra.mrb[0].mxu0 %v115
  %v208 = vpop.f32.mrb[0].mxu0
  %v209 = vadd.f32 %v105, %v208
  %v210 = vpop.f32.mrb[0].mxu0
  %211 = vmatprep.mubr.f32.mxu0 0.0
  %212 = vmatmul.mubr.f32.gmra.mrb[0].mxu0 %v118
  %v213 = vpop.f32.mrb[0].mxu0
  %v214 = vadd.f32 %v105, %v213
  %v215 = vpop.f32.mrb[0].mxu0
  %216 = vmatprep.mubr.f32.mxu0 0.0
  %217 = vmatmul.mubr.f32.gmra.mrb[0].mxu0 %v121
  %v218 = vpop.f32.mrb[0].mxu0
  %v219 = vadd.f32 %v105, %v218
  %v220 = vpop.f32.mrb[0].mxu0
  %221 = vmatprep.mubr.f32.mxu0 0.0
  %222 = vmatmul.mubr.f32.gmra.mrb[0].mxu0 %v124
  %v223 = vpop.f32.mrb[0].mxu0
  %v224 = vadd.f32 %v105, %v223
  %v225 = vpop.f32.mrb[0].mxu0
  %226 = vmatprep.mubr.f32.mxu0 0.0
  %227 = vmatmul.mubr.f32.gmra.mrb[0].mxu0 %v127
  %v228 = vpop.f32.mrb[0].mxu0
  %v229 = vadd.f32 %v105, %v228
  %v230 = vpop.f32.mrb[0].mxu0
  %231 = vmatprep.mubr.f32.mxu0 0.0
  %232 = vmatmul.mubr.f32.gmra.mrb[0].mxu0 %v130
  %v233 = vpop.f32.mrb[0].mxu0
  %v234 = vadd.f32 %v105, %v233
  %v235 = vpop.f32.mrb[0].mxu0
  %236 = vdwg.mxu0
  %v238 = vsel %vm41, %v33, 0
  %v241 = vsel %vm41, %v34, 0
  %v244 = vsel %vm41, %v35, 0
  %v247 = vsel %vm41, %v36, 0
  %v250 = vsel %vm41, %v37, 0
  %v253 = vsel %vm41, %v38, 0
  %v256 = vsel %vm41, %v39, 0
  %v259 = vsel %vm41, %v40, 0
  %261 = vmatprep.subr.mxu0 0.0
  %262 = vmatpush1.msra.mxu0 %v199
  %263 = vmatprep.subr.mxu0 0.0
  %264 = vmatpush1.msra.mxu0 %v204
  %265 = vmatprep.subr.mxu0 0.0
  %266 = vmatpush1.msra.mxu0 %v209
  %267 = vmatprep.subr.mxu0 0.0
  %268 = vmatpush1.msra.mxu0 %v214
  %269 = vmatprep.subr.mxu0 0.0
  %270 = vmatpush1.msra.mxu0 %v219
  %271 = vmatprep.subr.mxu0 0.0
  %272 = vmatpush1.msra.mxu0 %v224
  %273 = vmatprep.subr.mxu0 0.0
  %274 = vmatpush1.msra.mxu0 %v229
  %275 = vmatprep.subr.mxu0 0.0
  %276 = vmatpush1.msra.mxu0 %v234
  %277 = vmatprep.subr.mxu0 0.0
  %278 = vmatpush1.msra.mxu0 0.0
  %279 = vmatprep.subr.mxu0 0.0
  %280 = vmatpush1.msra.mxu0 0.0
  %281 = vmatprep.subr.mxu0 0.0
  %282 = vmatpush1.msra.mxu0 0.0
  %283 = vmatprep.subr.mxu0 0.0
  %284 = vmatpush1.msra.mxu0 0.0
  %285 = vmatprep.subr.mxu0 0.0
  %286 = vmatpush1.msra.mxu0 0.0
  %287 = vmatprep.subr.mxu0 0.0
  %288 = vmatpush1.msra.mxu0 0.0
  %289 = vmatprep.subr.mxu0 0.0
  %290 = vmatpush1.msra.mxu0 0.0
  %291 = vmatprep.subr.mxu0 0.0
  %292 = vmatpush1.msra.mxu0 0.0
  %293 = vmatprep.subr.mxu0 0.0
  %294 = vmatpush1.msra.mxu0 0.0
  %295 = vmatprep.subr.mxu0 0.0
  %296 = vmatpush1.msra.mxu0 0.0
  %297 = vmatprep.subr.mxu0 0.0
  %298 = vmatpush1.msra.mxu0 0.0
  %299 = vmatprep.subr.mxu0 0.0
  %300 = vmatpush1.msra.mxu0 0.0
  %301 = vmatprep.subr.mxu0 0.0
  %302 = vmatpush1.msra.mxu0 0.0
  %303 = vmatprep.subr.mxu0 0.0
  %304 = vmatpush1.msra.mxu0 0.0
  %305 = vmatprep.subr.mxu0 0.0
  %306 = vmatpush1.msra.mxu0 0.0
  %307 = vmatprep.subr.mxu0 0.0
  %308 = vmatpush1.msra.mxu0 0.0
  %309 = vmatprep.subr.mxu0 0.0
  %310 = vmatpush1.msra.mxu0 0.0
  %311 = vmatprep.subr.mxu0 0.0
  %312 = vmatpush1.msra.mxu0 0.0
  %313 = vmatprep.subr.mxu0 0.0
  %314 = vmatpush1.msra.mxu0 0.0
  %315 = vmatprep.subr.mxu0 0.0
  %316 = vmatpush1.msra.mxu0 0.0
  %317 = vmatprep.subr.mxu0 0.0
  %318 = vmatpush1.msra.mxu0 0.0
  %319 = vmatprep.subr.mxu0 0.0
  %320 = vmatpush1.msra.mxu0 0.0
  %321 = vmatprep.subr.mxu0 0.0
  %322 = vmatpush1.msra.mxu0 0.0
  %323 = vmatprep.subr.mxu0 0.0
  %324 = vmatpush1.msra.mxu0 0.0
  %325 = vmatprep.mubr.f32.mxu0 0.0
  %326 = vmatmul.mubr.f32.gmra.mrb[0].mxu0 %v238
  %v327 = vpop.f32.mrb[0].mxu0
  %v328 = vadd.f32 0.0, %v327
  %v329 = vpop.f32.mrb[0].mxu0
  %330 = vmatprep.mubr.f32.mxu0 0.0
  %331 = vmatmul.mubr.f32.gmra.mrb[0].mxu0 %v241
  %v332 = vpop.f32.mrb[0].mxu0
  %v333 = vadd.f32 0.0, %v332
  %v334 = vpop.f32.mrb[0].mxu0
  %335 = vmatprep.mubr.f32.mxu0 0.0
  %336 = vmatmul.mubr.f32.gmra.mrb[0].mxu0 %v244
  %v337 = vpop.f32.mrb[0].mxu0
  %v338 = vadd.f32 0.0, %v337
  %v339 = vpop.f32.mrb[0].mxu0
  %340 = vmatprep.mubr.f32.mxu0 0.0
  %341 = vmatmul.mubr.f32.gmra.mrb[0].mxu0 %v247
  %v342 = vpop.f32.mrb[0].mxu0
  %v343 = vadd.f32 0.0, %v342
  %v344 = vpop.f32.mrb[0].mxu0
  %345 = vmatprep.mubr.f32.mxu0 0.0
  %346 = vmatmul.mubr.f32.gmra.mrb[0].mxu0 %v250
  %v347 = vpop.f32.mrb[0].mxu0
  %v348 = vadd.f32 0.0, %v347
  %v349 = vpop.f32.mrb[0].mxu0
  %350 = vmatprep.mubr.f32.mxu0 0.0
  %351 = vmatmul.mubr.f32.gmra.mrb[0].mxu0 %v253
  %v352 = vpop.f32.mrb[0].mxu0
  %v353 = vadd.f32 0.0, %v352
  %v354 = vpop.f32.mrb[0].mxu0
  %355 = vmatprep.mubr.f32.mxu0 0.0
  %356 = vmatmul.mubr.f32.gmra.mrb[0].mxu0 %v256
  %v357 = vpop.f32.mrb[0].mxu0
  %v358 = vadd.f32 0.0, %v357
  %v359 = vpop.f32.mrb[0].mxu0
  %360 = vmatprep.mubr.f32.mxu0 0.0
  %361 = vmatmul.mubr.f32.gmra.mrb[0].mxu0 %v259
  %v362 = vpop.f32.mrb[0].mxu0
  %v363 = vadd.f32 0.0, %v362
  %v364 = vpop.f32.mrb[0].mxu0
  %365 = vdwg.mxu0
  %367 = vset.pattern.permute.xlu0 16
  %368 = vperm.xlu0 %367, %v199
  %v369 = vpop.permute.xlu0 %368
  %372 = vset.pattern.permute.xlu0 16
  %373 = vperm.xlu0 %372, %v204
  %v374 = vpop.permute.xlu0 %373
  %377 = vset.pattern.permute.xlu0 16
  %378 = vperm.xlu0 %377, %v209
  %v379 = vpop.permute.xlu0 %378
  %382 = vset.pattern.permute.xlu0 16
  %383 = vperm.xlu0 %382, %v214
  %v384 = vpop.permute.xlu0 %383
  %387 = vset.pattern.permute.xlu0 16
  %388 = vperm.xlu0 %387, %v219
  %v389 = vpop.permute.xlu0 %388
  %392 = vset.pattern.permute.xlu0 16
  %393 = vperm.xlu0 %392, %v224
  %v394 = vpop.permute.xlu0 %393
  %397 = vset.pattern.permute.xlu0 16
  %398 = vperm.xlu0 %397, %v229
  %v399 = vpop.permute.xlu0 %398
  %402 = vset.pattern.permute.xlu0 16
  %403 = vperm.xlu0 %402, %v234
  %v404 = vpop.permute.xlu0 %403
  %v406 = vmul.f32 %v369, %v199
  %v407 = vmul.f32 %v374, %v204
  %v408 = vmul.f32 %v379, %v209
  %v409 = vmul.f32 %v384, %v214
  %v410 = vmul.f32 %v389, %v219
  %v411 = vmul.f32 %v394, %v224
  %v412 = vmul.f32 %v399, %v229
  %v413 = vmul.f32 %v404, %v234
  %414 = vmatprep.subr.mxu0 0.0
  %415 = vmatpush1.msra.mxu0 %v406
  %416 = vmatprep.subr.mxu0 0.0
  %417 = vmatpush1.msra.mxu0 %v407
  %418 = vmatprep.subr.mxu0 0.0
  %419 = vmatpush1.msra.mxu0 %v408
  %420 = vmatprep.subr.mxu0 0.0
  %421 = vmatpush1.msra.mxu0 %v409
  %422 = vmatprep.subr.mxu0 0.0
  %423 = vmatpush1.msra.mxu0 %v410
  %424 = vmatprep.subr.mxu0 0.0
  %425 = vmatpush1.msra.mxu0 %v411
  %426 = vmatprep.subr.mxu0 0.0
  %427 = vmatpush1.msra.mxu0 %v412
  %428 = vmatprep.subr.mxu0 0.0
  %429 = vmatpush1.msra.mxu0 %v413
  %430 = vmatprep.subr.mxu0 0.0
  %431 = vmatpush1.msra.mxu0 0.0
  %432 = vmatprep.subr.mxu0 0.0
  %433 = vmatpush1.msra.mxu0 0.0
  %434 = vmatprep.subr.mxu0 0.0
  %435 = vmatpush1.msra.mxu0 0.0
  %436 = vmatprep.subr.mxu0 0.0
  %437 = vmatpush1.msra.mxu0 0.0
  %438 = vmatprep.subr.mxu0 0.0
  %439 = vmatpush1.msra.mxu0 0.0
  %440 = vmatprep.subr.mxu0 0.0
  %441 = vmatpush1.msra.mxu0 0.0
  %442 = vmatprep.subr.mxu0 0.0
  %443 = vmatpush1.msra.mxu0 0.0
  %444 = vmatprep.subr.mxu0 0.0
  %445 = vmatpush1.msra.mxu0 0.0
  %446 = vmatprep.subr.mxu0 0.0
  %447 = vmatpush1.msra.mxu0 0.0
  %448 = vmatprep.subr.mxu0 0.0
  %449 = vmatpush1.msra.mxu0 0.0
  %450 = vmatprep.subr.mxu0 0.0
  %451 = vmatpush1.msra.mxu0 0.0
  %452 = vmatprep.subr.mxu0 0.0
  %453 = vmatpush1.msra.mxu0 0.0
  %454 = vmatprep.subr.mxu0 0.0
  %455 = vmatpush1.msra.mxu0 0.0
  %456 = vmatprep.subr.mxu0 0.0
  %457 = vmatpush1.msra.mxu0 0.0
  %458 = vmatprep.subr.mxu0 0.0
  %459 = vmatpush1.msra.mxu0 0.0
  %460 = vmatprep.subr.mxu0 0.0
  %461 = vmatpush1.msra.mxu0 0.0
  %462 = vmatprep.subr.mxu0 0.0
  %463 = vmatpush1.msra.mxu0 0.0
  %464 = vmatprep.subr.mxu0 0.0
  %465 = vmatpush1.msra.mxu0 0.0
  %466 = vmatprep.subr.mxu0 0.0
  %467 = vmatpush1.msra.mxu0 0.0
  %468 = vmatprep.subr.mxu0 0.0
  %469 = vmatpush1.msra.mxu0 0.0
  %470 = vmatprep.subr.mxu0 0.0
  %471 = vmatpush1.msra.mxu0 0.0
  %472 = vmatprep.subr.mxu0 0.0
  %473 = vmatpush1.msra.mxu0 0.0
  %474 = vmatprep.subr.mxu0 0.0
  %475 = vmatpush1.msra.mxu0 0.0
  %476 = vmatprep.subr.mxu0 0.0
  %477 = vmatpush1.msra.mxu0 0.0
  %478 = vmatprep.mubr.f32.mxu0 0.0
  %479 = vmatmul.mubr.f32.gmra.mrb[0].mxu0 %v238
  %v480 = vpop.f32.mrb[0].mxu0
  %v481 = vadd.f32 0.0, %v480
  %v482 = vpop.f32.mrb[0].mxu0
  %483 = vmatprep.mubr.f32.mxu0 0.0
  %484 = vmatmul.mubr.f32.gmra.mrb[0].mxu0 %v241
  %v485 = vpop.f32.mrb[0].mxu0
  %v486 = vadd.f32 0.0, %v485
  %v487 = vpop.f32.mrb[0].mxu0
  %488 = vmatprep.mubr.f32.mxu0 0.0
  %489 = vmatmul.mubr.f32.gmra.mrb[0].mxu0 %v244
  %v490 = vpop.f32.mrb[0].mxu0
  %v491 = vadd.f32 0.0, %v490
  %v492 = vpop.f32.mrb[0].mxu0
  %493 = vmatprep.mubr.f32.mxu0 0.0
  %494 = vmatmul.mubr.f32.gmra.mrb[0].mxu0 %v247
  %v495 = vpop.f32.mrb[0].mxu0
  %v496 = vadd.f32 0.0, %v495
  %v497 = vpop.f32.mrb[0].mxu0
  %498 = vmatprep.mubr.f32.mxu0 0.0
  %499 = vmatmul.mubr.f32.gmra.mrb[0].mxu0 %v250
  %v500 = vpop.f32.mrb[0].mxu0
  %v501 = vadd.f32 0.0, %v500
  %v502 = vpop.f32.mrb[0].mxu0
  %503 = vmatprep.mubr.f32.mxu0 0.0
  %504 = vmatmul.mubr.f32.gmra.mrb[0].mxu0 %v253
  %v505 = vpop.f32.mrb[0].mxu0
  %v506 = vadd.f32 0.0, %v505
  %v507 = vpop.f32.mrb[0].mxu0
  %508 = vmatprep.mubr.f32.mxu0 0.0
  %509 = vmatmul.mubr.f32.gmra.mrb[0].mxu0 %v256
  %v510 = vpop.f32.mrb[0].mxu0
  %v511 = vadd.f32 0.0, %v510
  %v512 = vpop.f32.mrb[0].mxu0
  %513 = vmatprep.mubr.f32.mxu0 0.0
  %514 = vmatmul.mubr.f32.gmra.mrb[0].mxu0 %v259
  %v515 = vpop.f32.mrb[0].mxu0
  %v516 = vadd.f32 0.0, %v515
  %v517 = vpop.f32.mrb[0].mxu0
  %518 = vdwg.mxu0
  %519 = vset.pattern.permute.xlu0 17
  %520 = vperm.xlu0 %519, %v199
  %v521 = vpop.permute.xlu0 %520
  %523 = vset.pattern.permute.xlu0 17
  %524 = vperm.xlu0 %523, %v204
  %v525 = vpop.permute.xlu0 %524
  %527 = vset.pattern.permute.xlu0 17
  %528 = vperm.xlu0 %527, %v209
  %v529 = vpop.permute.xlu0 %528
  %531 = vset.pattern.permute.xlu0 17
  %532 = vperm.xlu0 %531, %v214
  %v533 = vpop.permute.xlu0 %532
  %535 = vset.pattern.permute.xlu0 17
  %536 = vperm.xlu0 %535, %v219
  %v537 = vpop.permute.xlu0 %536
  %539 = vset.pattern.permute.xlu0 17
  %540 = vperm.xlu0 %539, %v224
  %v541 = vpop.permute.xlu0 %540
  %543 = vset.pattern.permute.xlu0 17
  %544 = vperm.xlu0 %543, %v229
  %v545 = vpop.permute.xlu0 %544
  %547 = vset.pattern.permute.xlu0 17
  %548 = vperm.xlu0 %547, %v234
  %v549 = vpop.permute.xlu0 %548
  %v551 = vmul.f32 %v521, %v328
  %v552 = vmul.f32 %v525, %v333
  %v553 = vmul.f32 %v529, %v338
  %v554 = vmul.f32 %v533, %v343
  %v555 = vmul.f32 %v537, %v348
  %v556 = vmul.f32 %v541, %v353
  %v557 = vmul.f32 %v545, %v358
  %v558 = vmul.f32 %v549, %v363
  %v559 = vadd.f32 %v551, %v481
  %v560 = vadd.f32 %v552, %v486
  %v561 = vadd.f32 %v553, %v491
  %v562 = vadd.f32 %v554, %v496
  %v563 = vadd.f32 %v555, %v501
  %v564 = vadd.f32 %v556, %v506
  %v565 = vadd.f32 %v557, %v511
  %v566 = vadd.f32 %v558, %v516
  %v567 = vmul.f32 %v559, %v75
  %v568 = vmul.f32 %v560, %v77
  %v569 = vmul.f32 %v561, %v79
  %v570 = vmul.f32 %v562, %v81
  %v571 = vmul.f32 %v563, %v83
  %v572 = vmul.f32 %v564, %v85
  %v573 = vmul.f32 %v565, %v87
  %v574 = vmul.f32 %v566, %v89
  %v575 = vmax.f32 %v567, 0.0
  %v576 = vmax.f32 %v568, 0.0
  %v577 = vmax.f32 %v569, 0.0
  %v578 = vmax.f32 %v570, 0.0
  %v579 = vmax.f32 %v571, 0.0
  %v580 = vmax.f32 %v572, 0.0
  %v581 = vmax.f32 %v573, 0.0
  %v582 = vmax.f32 %v574, 0.0
  %v583 = vld [vmem:[%s4] sm:$0xff]
  %v584 = vld [vmem:[%s4 + $0x8] sm:$0xff]
  %v585 = vld [vmem:[%s5] sm:$0x1]
  %v587 = vlaneseq
  %v588 = vshrl.u32 %v587, 7
  %v589 = vsub.s32 0, %v588
  %v590 = vrot.slane %v585, %v589
  %v593 = vsel %vm107, %v575, 0
  %v596 = vsel %vm107, %v576, 0
  %v599 = vsel %vm107, %v577, 0
  %v602 = vsel %vm107, %v578, 0
  %v605 = vsel %vm107, %v579, 0
  %v608 = vsel %vm107, %v580, 0
  %v611 = vsel %vm107, %v581, 0
  %v614 = vsel %vm107, %v582, 0
  %616 = vmatprep.subr.mxu0 0.0
  %617 = vmatpush1.msra.mxu0 %v583
  %618 = vmatprep.subr.mxu0 0.0
  %619 = vmatpush1.msra.mxu0 %v584
  %620 = vmatprep.subr.mxu0 0.0
  %621 = vmatpush1.msra.mxu0 0.0
  %622 = vmatprep.subr.mxu0 0.0
  %623 = vmatpush1.msra.mxu0 0.0
  %624 = vmatprep.subr.mxu0 0.0
  %625 = vmatpush1.msra.mxu0 0.0
  %626 = vmatprep.subr.mxu0 0.0
  %627 = vmatpush1.msra.mxu0 0.0
  %628 = vmatprep.subr.mxu0 0.0
  %629 = vmatpush1.msra.mxu0 0.0
  %630 = vmatprep.subr.mxu0 0.0
  %631 = vmatpush1.msra.mxu0 0.0
  %632 = vmatprep.subr.mxu0 0.0
  %633 = vmatpush1.msra.mxu0 0.0
  %634 = vmatprep.subr.mxu0 0.0
  %635 = vmatpush1.msra.mxu0 0.0
  %636 = vmatprep.subr.mxu0 0.0
  %637 = vmatpush1.msra.mxu0 0.0
  %638 = vmatprep.subr.mxu0 0.0
  %639 = vmatpush1.msra.mxu0 0.0
  %640 = vmatprep.subr.mxu0 0.0
  %641 = vmatpush1.msra.mxu0 0.0
  %642 = vmatprep.subr.mxu0 0.0
  %643 = vmatpush1.msra.mxu0 0.0
  %644 = vmatprep.subr.mxu0 0.0
  %645 = vmatpush1.msra.mxu0 0.0
  %646 = vmatprep.subr.mxu0 0.0
  %647 = vmatpush1.msra.mxu0 0.0
  %648 = vmatprep.subr.mxu0 0.0
  %649 = vmatpush1.msra.mxu0 0.0
  %650 = vmatprep.subr.mxu0 0.0
  %651 = vmatpush1.msra.mxu0 0.0
  %652 = vmatprep.subr.mxu0 0.0
  %653 = vmatpush1.msra.mxu0 0.0
  %654 = vmatprep.subr.mxu0 0.0
  %655 = vmatpush1.msra.mxu0 0.0
  %656 = vmatprep.subr.mxu0 0.0
  %657 = vmatpush1.msra.mxu0 0.0
  %658 = vmatprep.subr.mxu0 0.0
  %659 = vmatpush1.msra.mxu0 0.0
  %660 = vmatprep.subr.mxu0 0.0
  %661 = vmatpush1.msra.mxu0 0.0
  %662 = vmatprep.subr.mxu0 0.0
  %663 = vmatpush1.msra.mxu0 0.0
  %664 = vmatprep.subr.mxu0 0.0
  %665 = vmatpush1.msra.mxu0 0.0
  %666 = vmatprep.subr.mxu0 0.0
  %667 = vmatpush1.msra.mxu0 0.0
  %668 = vmatprep.subr.mxu0 0.0
  %669 = vmatpush1.msra.mxu0 0.0
  %670 = vmatprep.subr.mxu0 0.0
  %671 = vmatpush1.msra.mxu0 0.0
  %672 = vmatprep.subr.mxu0 0.0
  %673 = vmatpush1.msra.mxu0 0.0
  %674 = vmatprep.subr.mxu0 0.0
  %675 = vmatpush1.msra.mxu0 0.0
  %676 = vmatprep.subr.mxu0 0.0
  %677 = vmatpush1.msra.mxu0 0.0
  %678 = vmatprep.subr.mxu0 0.0
  %679 = vmatpush1.msra.mxu0 0.0
  %680 = vmatprep.mubr.f32.mxu0 0.0
  %681 = vmatmul.mubr.f32.gmra.mrb[0].mxu0 %v593
  %v682 = vpop.f32.mrb[0].mxu0
  %v683 = vadd.f32 %v590, %v682
  %v684 = vpop.f32.mrb[0].mxu0
  %685 = vmatprep.mubr.f32.mxu0 0.0
  %686 = vmatmul.mubr.f32.gmra.mrb[0].mxu0 %v596
  %v687 = vpop.f32.mrb[0].mxu0
  %v688 = vadd.f32 %v590, %v687
  %v689 = vpop.f32.mrb[0].mxu0
  %690 = vmatprep.mubr.f32.mxu0 0.0
  %691 = vmatmul.mubr.f32.gmra.mrb[0].mxu0 %v599
  %v692 = vpop.f32.mrb[0].mxu0
  %v693 = vadd.f32 %v590, %v692
  %v694 = vpop.f32.mrb[0].mxu0
  %695 = vmatprep.mubr.f32.mxu0 0.0
  %696 = vmatmul.mubr.f32.gmra.mrb[0].mxu0 %v602
  %v697 = vpop.f32.mrb[0].mxu0
  %v698 = vadd.f32 %v590, %v697
  %v699 = vpop.f32.mrb[0].mxu0
  %700 = vmatprep.mubr.f32.mxu0 0.0
  %701 = vmatmul.mubr.f32.gmra.mrb[0].mxu0 %v605
  %v702 = vpop.f32.mrb[0].mxu0
  %v703 = vadd.f32 %v590, %v702
  %v704 = vpop.f32.mrb[0].mxu0
  %705 = vmatprep.mubr.f32.mxu0 0.0
  %706 = vmatmul.mubr.f32.gmra.mrb[0].mxu0 %v608
  %v707 = vpop.f32.mrb[0].mxu0
  %v708 = vadd.f32 %v590, %v707
  %v709 = vpop.f32.mrb[0].mxu0
  %710 = vmatprep.mubr.f32.mxu0 0.0
  %711 = vmatmul.mubr.f32.gmra.mrb[0].mxu0 %v611
  %v712 = vpop.f32.mrb[0].mxu0
  %v713 = vadd.f32 %v590, %v712
  %v714 = vpop.f32.mrb[0].mxu0
  %715 = vmatprep.mubr.f32.mxu0 0.0
  %716 = vmatmul.mubr.f32.gmra.mrb[0].mxu0 %v614
  %v717 = vpop.f32.mrb[0].mxu0
  %v718 = vadd.f32 %v590, %v717
  %v719 = vpop.f32.mrb[0].mxu0
  %720 = vdwg.mxu0
  %721 = vmatprep.subr.mxu0 0.0
  %722 = vmatpush1.msra.mxu0 %v683
  %723 = vmatprep.subr.mxu0 0.0
  %724 = vmatpush1.msra.mxu0 %v688
  %725 = vmatprep.subr.mxu0 0.0
  %726 = vmatpush1.msra.mxu0 %v693
  %727 = vmatprep.subr.mxu0 0.0
  %728 = vmatpush1.msra.mxu0 %v698
  %729 = vmatprep.subr.mxu0 0.0
  %730 = vmatpush1.msra.mxu0 %v703
  %731 = vmatprep.subr.mxu0 0.0
  %732 = vmatpush1.msra.mxu0 %v708
  %733 = vmatprep.subr.mxu0 0.0
  %734 = vmatpush1.msra.mxu0 %v713
  %735 = vmatprep.subr.mxu0 0.0
  %736 = vmatpush1.msra.mxu0 %v718
  %737 = vmatprep.subr.mxu0 0.0
  %738 = vmatpush1.msra.mxu0 0.0
  %739 = vmatprep.subr.mxu0 0.0
  %740 = vmatpush1.msra.mxu0 0.0
  %741 = vmatprep.subr.mxu0 0.0
  %742 = vmatpush1.msra.mxu0 0.0
  %743 = vmatprep.subr.mxu0 0.0
  %744 = vmatpush1.msra.mxu0 0.0
  %745 = vmatprep.subr.mxu0 0.0
  %746 = vmatpush1.msra.mxu0 0.0
  %747 = vmatprep.subr.mxu0 0.0
  %748 = vmatpush1.msra.mxu0 0.0
  %749 = vmatprep.subr.mxu0 0.0
  %750 = vmatpush1.msra.mxu0 0.0
  %751 = vmatprep.subr.mxu0 0.0
  %752 = vmatpush1.msra.mxu0 0.0
  %753 = vmatprep.subr.mxu0 0.0
  %754 = vmatpush1.msra.mxu0 0.0
  %755 = vmatprep.subr.mxu0 0.0
  %756 = vmatpush1.msra.mxu0 0.0
  %757 = vmatprep.subr.mxu0 0.0
  %758 = vmatpush1.msra.mxu0 0.0
  %759 = vmatprep.subr.mxu0 0.0
  %760 = vmatpush1.msra.mxu0 0.0
  %761 = vmatprep.subr.mxu0 0.0
  %762 = vmatpush1.msra.mxu0 0.0
  %763 = vmatprep.subr.mxu0 0.0
  %764 = vmatpush1.msra.mxu0 0.0
  %765 = vmatprep.subr.mxu0 0.0
  %766 = vmatpush1.msra.mxu0 0.0
  %767 = vmatprep.subr.mxu0 0.0
  %768 = vmatpush1.msra.mxu0 0.0
  %769 = vmatprep.subr.mxu0 0.0
  %770 = vmatpush1.msra.mxu0 0.0
  %771 = vmatprep.subr.mxu0 0.0
  %772 = vmatpush1.msra.mxu0 0.0
  %773 = vmatprep.subr.mxu0 0.0
  %774 = vmatpush1.msra.mxu0 0.0
  %775 = vmatprep.subr.mxu0 0.0
  %776 = vmatpush1.msra.mxu0 0.0
  %777 = vmatprep.subr.mxu0 0.0
  %778 = vmatpush1.msra.mxu0 0.0
  %779 = vmatprep.subr.mxu0 0.0
  %780 = vmatpush1.msra.mxu0 0.0
  %781 = vmatprep.subr.mxu0 0.0
  %782 = vmatpush1.msra.mxu0 0.0
  %783 = vmatprep.subr.mxu0 0.0
  %784 = vmatpush1.msra.mxu0 0.0
  %785 = vmatprep.mubr.f32.mxu0 0.0
  %786 = vmatmul.mubr.f32.gmra.mrb[0].mxu0 %v238
  %v787 = vpop.f32.mrb[0].mxu0
  %v788 = vadd.f32 0.0, %v787
  %v789 = vpop.f32.mrb[0].mxu0
  %790 = vmatprep.mubr.f32.mxu0 0.0
  %791 = vmatmul.mubr.f32.gmra.mrb[0].mxu0 %v241
  %v792 = vpop.f32.mrb[0].mxu0
  %v793 = vadd.f32 0.0, %v792
  %v794 = vpop.f32.mrb[0].mxu0
  %795 = vmatprep.mubr.f32.mxu0 0.0
  %796 = vmatmul.mubr.f32.gmra.mrb[0].mxu0 %v244
  %v797 = vpop.f32.mrb[0].mxu0
  %v798 = vadd.f32 0.0, %v797
  %v799 = vpop.f32.mrb[0].mxu0
  %800 = vmatprep.mubr.f32.mxu0 0.0
  %801 = vmatmul.mubr.f32.gmra.mrb[0].mxu0 %v247
  %v802 = vpop.f32.mrb[0].mxu0
  %v803 = vadd.f32 0.0, %v802
  %v804 = vpop.f32.mrb[0].mxu0
  %805 = vmatprep.mubr.f32.mxu0 0.0
  %806 = vmatmul.mubr.f32.gmra.mrb[0].mxu0 %v250
  %v807 = vpop.f32.mrb[0].mxu0
  %v808 = vadd.f32 0.0, %v807
  %v809 = vpop.f32.mrb[0].mxu0
  %810 = vmatprep.mubr.f32.mxu0 0.0
  %811 = vmatmul.mubr.f32.gmra.mrb[0].mxu0 %v253
  %v812 = vpop.f32.mrb[0].mxu0
  %v813 = vadd.f32 0.0, %v812
  %v814 = vpop.f32.mrb[0].mxu0
  %815 = vmatprep.mubr.f32.mxu0 0.0
  %816 = vmatmul.mubr.f32.gmra.mrb[0].mxu0 %v256
  %v817 = vpop.f32.mrb[0].mxu0
  %v818 = vadd.f32 0.0, %v817
  %v819 = vpop.f32.mrb[0].mxu0
  %820 = vmatprep.mubr.f32.mxu0 0.0
  %821 = vmatmul.mubr.f32.gmra.mrb[0].mxu0 %v259
  %v822 = vpop.f32.mrb[0].mxu0
  %v823 = vadd.f32 0.0, %v822
  %v824 = vpop.f32.mrb[0].mxu0
  %825 = vdwg.mxu0
  %827 = vset.pattern.permute.xlu0 8
  %828 = vperm.xlu0 %827, %v683
  %v829 = vpop.permute.xlu0 %828
  %832 = vset.pattern.permute.xlu0 8
  %833 = vperm.xlu0 %832, %v688
  %v834 = vpop.permute.xlu0 %833
  %837 = vset.pattern.permute.xlu0 8
  %838 = vperm.xlu0 %837, %v693
  %v839 = vpop.permute.xlu0 %838
  %842 = vset.pattern.permute.xlu0 8
  %843 = vperm.xlu0 %842, %v698
  %v844 = vpop.permute.xlu0 %843
  %847 = vset.pattern.permute.xlu0 8
  %848 = vperm.xlu0 %847, %v703
  %v849 = vpop.permute.xlu0 %848
  %852 = vset.pattern.permute.xlu0 8
  %853 = vperm.xlu0 %852, %v708
  %v854 = vpop.permute.xlu0 %853
  %857 = vset.pattern.permute.xlu0 8
  %858 = vperm.xlu0 %857, %v713
  %v859 = vpop.permute.xlu0 %858
  %862 = vset.pattern.permute.xlu0 8
  %863 = vperm.xlu0 %862, %v718
  %v864 = vpop.permute.xlu0 %863
  %v866 = vmul.f32 %v829, %v683
  %v867 = vmul.f32 %v834, %v688
  %v868 = vmul.f32 %v839, %v693
  %v869 = vmul.f32 %v844, %v698
  %v870 = vmul.f32 %v849, %v703
  %v871 = vmul.f32 %v854, %v708
  %v872 = vmul.f32 %v859, %v713
  %v873 = vmul.f32 %v864, %v718
  %874 = vmatprep.subr.mxu0 0.0
  %875 = vmatpush1.msra.mxu0 %v866
  %876 = vmatprep.subr.mxu0 0.0
  %877 = vmatpush1.msra.mxu0 %v867
  %878 = vmatprep.subr.mxu0 0.0
  %879 = vmatpush1.msra.mxu0 %v868
  %880 = vmatprep.subr.mxu0 0.0
  %881 = vmatpush1.msra.mxu0 %v869
  %882 = vmatprep.subr.mxu0 0.0
  %883 = vmatpush1.msra.mxu0 %v870
  %884 = vmatprep.subr.mxu0 0.0
  %885 = vmatpush1.msra.mxu0 %v871
  %886 = vmatprep.subr.mxu0 0.0
  %887 = vmatpush1.msra.mxu0 %v872
  %888 = vmatprep.subr.mxu0 0.0
  %889 = vmatpush1.msra.mxu0 %v873
  %890 = vmatprep.subr.mxu0 0.0
  %891 = vmatpush1.msra.mxu0 0.0
  %892 = vmatprep.subr.mxu0 0.0
  %893 = vmatpush1.msra.mxu0 0.0
  %894 = vmatprep.subr.mxu0 0.0
  %895 = vmatpush1.msra.mxu0 0.0
  %896 = vmatprep.subr.mxu0 0.0
  %897 = vmatpush1.msra.mxu0 0.0
  %898 = vmatprep.subr.mxu0 0.0
  %899 = vmatpush1.msra.mxu0 0.0
  %900 = vmatprep.subr.mxu0 0.0
  %901 = vmatpush1.msra.mxu0 0.0
  %902 = vmatprep.subr.mxu0 0.0
  %903 = vmatpush1.msra.mxu0 0.0
  %904 = vmatprep.subr.mxu0 0.0
  %905 = vmatpush1.msra.mxu0 0.0
  %906 = vmatprep.subr.mxu0 0.0
  %907 = vmatpush1.msra.mxu0 0.0
  %908 = vmatprep.subr.mxu0 0.0
  %909 = vmatpush1.msra.mxu0 0.0
  %910 = vmatprep.subr.mxu0 0.0
  %911 = vmatpush1.msra.mxu0 0.0
  %912 = vmatprep.subr.mxu0 0.0
  %913 = vmatpush1.msra.mxu0 0.0
  %914 = vmatprep.subr.mxu0 0.0
  %915 = vmatpush1.msra.mxu0 0.0
  %916 = vmatprep.subr.mxu0 0.0
  %917 = vmatpush1.msra.mxu0 0.0
  %918 = vmatprep.subr.mxu0 0.0
  %919 = vmatpush1.msra.mxu0 0.0
  %920 = vmatprep.subr.mxu0 0.0
  %921 = vmatpush1.msra.mxu0 0.0
  %922 = vmatprep.subr.mxu0 0.0
  %923 = vmatpush1.msra.mxu0 0.0
  %924 = vmatprep.subr.mxu0 0.0
  %925 = vmatpush1.msra.mxu0 0.0
  %926 = vmatprep.subr.mxu0 0.0
  %927 = vmatpush1.msra.mxu0 0.0
  %928 = vmatprep.subr.mxu0 0.0
  %929 = vmatpush1.msra.mxu0 0.0
  %930 = vmatprep.subr.mxu0 0.0
  %931 = vmatpush1.msra.mxu0 0.0
  %932 = vmatprep.subr.mxu0 0.0
  %933 = vmatpush1.msra.mxu0 0.0
  %934 = vmatprep.subr.mxu0 0.0
  %935 = vmatpush1.msra.mxu0 0.0
  %936 = vmatprep.subr.mxu0 0.0
  %937 = vmatpush1.msra.mxu0 0.0
  %938 = vmatprep.mubr.f32.mxu0 0.0
  %939 = vmatmul.mubr.f32.gmra.mrb[0].mxu0 %v238
  %v940 = vpop.f32.mrb[0].mxu0
  %v941 = vadd.f32 0.0, %v940
  %v942 = vpop.f32.mrb[0].mxu0
  %943 = vmatprep.mubr.f32.mxu0 0.0
  %944 = vmatmul.mubr.f32.gmra.mrb[0].mxu0 %v241
  %v945 = vpop.f32.mrb[0].mxu0
  %v946 = vadd.f32 0.0, %v945
  %v947 = vpop.f32.mrb[0].mxu0
  %948 = vmatprep.mubr.f32.mxu0 0.0
  %949 = vmatmul.mubr.f32.gmra.mrb[0].mxu0 %v244
  %v950 = vpop.f32.mrb[0].mxu0
  %v951 = vadd.f32 0.0, %v950
  %v952 = vpop.f32.mrb[0].mxu0
  %953 = vmatprep.mubr.f32.mxu0 0.0
  %954 = vmatmul.mubr.f32.gmra.mrb[0].mxu0 %v247
  %v955 = vpop.f32.mrb[0].mxu0
  %v956 = vadd.f32 0.0, %v955
  %v957 = vpop.f32.mrb[0].mxu0
  %958 = vmatprep.mubr.f32.mxu0 0.0
  %959 = vmatmul.mubr.f32.gmra.mrb[0].mxu0 %v250
  %v960 = vpop.f32.mrb[0].mxu0
  %v961 = vadd.f32 0.0, %v960
  %v962 = vpop.f32.mrb[0].mxu0
  %963 = vmatprep.mubr.f32.mxu0 0.0
  %964 = vmatmul.mubr.f32.gmra.mrb[0].mxu0 %v253
  %v965 = vpop.f32.mrb[0].mxu0
  %v966 = vadd.f32 0.0, %v965
  %v967 = vpop.f32.mrb[0].mxu0
  %968 = vmatprep.mubr.f32.mxu0 0.0
  %969 = vmatmul.mubr.f32.gmra.mrb[0].mxu0 %v256
  %v970 = vpop.f32.mrb[0].mxu0
  %v971 = vadd.f32 0.0, %v970
  %v972 = vpop.f32.mrb[0].mxu0
  %973 = vmatprep.mubr.f32.mxu0 0.0
  %974 = vmatmul.mubr.f32.gmra.mrb[0].mxu0 %v259
  %v975 = vpop.f32.mrb[0].mxu0
  %v976 = vadd.f32 0.0, %v975
  %v977 = vpop.f32.mrb[0].mxu0
  %978 = vdwg.mxu0
  %979 = vset.pattern.permute.xlu0 9
  %980 = vperm.xlu0 %979, %v683
  %v981 = vpop.permute.xlu0 %980
  %983 = vset.pattern.permute.xlu0 9
  %984 = vperm.xlu0 %983, %v688
  %v985 = vpop.permute.xlu0 %984
  %987 = vset.pattern.permute.xlu0 9
  %988 = vperm.xlu0 %987, %v693
  %v989 = vpop.permute.xlu0 %988
  %991 = vset.pattern.permute.xlu0 9
  %992 = vperm.xlu0 %991, %v698
  %v993 = vpop.permute.xlu0 %992
  %995 = vset.pattern.permute.xlu0 9
  %996 = vperm.xlu0 %995, %v703
  %v997 = vpop.permute.xlu0 %996
  %999 = vset.pattern.permute.xlu0 9
  %1000 = vperm.xlu0 %999, %v708
  %v1001 = vpop.permute.xlu0 %1000
  %1003 = vset.pattern.permute.xlu0 9
  %1004 = vperm.xlu0 %1003, %v713
  %v1005 = vpop.permute.xlu0 %1004
  %1007 = vset.pattern.permute.xlu0 9
  %1008 = vperm.xlu0 %1007, %v718
  %v1009 = vpop.permute.xlu0 %1008
  %v1011 = vmul.f32 %v981, %v788
  %v1012 = vmul.f32 %v985, %v793
  %v1013 = vmul.f32 %v989, %v798
  %v1014 = vmul.f32 %v993, %v803
  %v1015 = vmul.f32 %v997, %v808
  %v1016 = vmul.f32 %v1001, %v813
  %v1017 = vmul.f32 %v1005, %v818
  %v1018 = vmul.f32 %v1009, %v823
  %v1019 = vadd.f32 %v1011, %v941
  %v1020 = vadd.f32 %v1012, %v946
  %v1021 = vadd.f32 %v1013, %v951
  %v1022 = vadd.f32 %v1014, %v956
  %v1023 = vadd.f32 %v1015, %v961
  %v1024 = vadd.f32 %v1016, %v966
  %v1025 = vadd.f32 %v1017, %v971
  %v1026 = vadd.f32 %v1018, %v976
  %v1027 = vmul.f32 %v1019, %v75
  %v1028 = vmul.f32 %v1020, %v77
  %v1029 = vmul.f32 %v1021, %v79
  %v1030 = vmul.f32 %v1022, %v81
  %v1031 = vmul.f32 %v1023, %v83
  %v1032 = vmul.f32 %v1024, %v85
  %v1033 = vmul.f32 %v1025, %v87
  %v1034 = vmul.f32 %v1026, %v89
  %vm1035 = vcmask 64512
  %v1036 = vsel %vm1035, %v1027, -inf
  %1037 = vmax.xlane.f32.xlu0 %v1036
  %v1038 = vpop.xlane.xlu0 %1037
  %v1039 = vsel %vm1035, %v1028, -inf
  %1040 = vmax.xlane.f32.xlu0 %v1039
  %v1041 = vpop.xlane.xlu0 %1040
  %v1042 = vsel %vm1035, %v1029, -inf
  %1043 = vmax.xlane.f32.xlu0 %v1042
  %v1044 = vpop.xlane.xlu0 %1043
  %v1045 = vsel %vm1035, %v1030, -inf
  %1046 = vmax.xlane.f32.xlu0 %v1045
  %v1047 = vpop.xlane.xlu0 %1046
  %v1048 = vsel %vm1035, %v1031, -inf
  %1049 = vmax.xlane.f32.xlu0 %v1048
  %v1050 = vpop.xlane.xlu0 %1049
  %v1051 = vsel %vm1035, %v1032, -inf
  %1052 = vmax.xlane.f32.xlu0 %v1051
  %v1053 = vpop.xlane.xlu0 %1052
  %v1054 = vsel %vm1035, %v1033, -inf
  %1055 = vmax.xlane.f32.xlu0 %v1054
  %v1056 = vpop.xlane.xlu0 %1055
  %v1057 = vsel %vm1035, %v1034, -inf
  %1058 = vmax.xlane.f32.xlu0 %v1057
  %v1059 = vpop.xlane.xlu0 %1058
  %v1060 = vsub.f32 %v1027, %v1038
  %v1061 = vsub.f32 %v1028, %v1041
  %v1062 = vsub.f32 %v1029, %v1044
  %v1063 = vsub.f32 %v1030, %v1047
  %v1064 = vsub.f32 %v1031, %v1050
  %v1065 = vsub.f32 %v1032, %v1053
  %v1066 = vsub.f32 %v1033, %v1056
  %v1067 = vsub.f32 %v1034, %v1059
  %v1068 = vmul.f32 %v1060, 1.442695
  %v1069 = vpow.pop %v1068
  %v1070 = vmul.f32 %v1061, 1.442695
  %v1071 = vpow.pop %v1070
  %v1072 = vmul.f32 %v1062, 1.442695
  %v1073 = vpow.pop %v1072
  %v1074 = vmul.f32 %v1063, 1.442695
  %v1075 = vpow.pop %v1074
  %v1076 = vmul.f32 %v1064, 1.442695
  %v1077 = vpow.pop %v1076
  %v1078 = vmul.f32 %v1065, 1.442695
  %v1079 = vpow.pop %v1078
  %v1080 = vmul.f32 %v1066, 1.442695
  %v1081 = vpow.pop %v1080
  %v1082 = vmul.f32 %v1067, 1.442695
  %v1083 = vpow.pop %v1082
  %v1084 = vsel %vm1035, %v1069, 0.0
  %1085 = vadd.xlane.f32.xlu0 %v1084
  %v1086 = vpop.xlane.xlu0 %1085
  %v1087 = vsel %vm1035, %v1071, 0.0
  %1088 = vadd.xlane.f32.xlu0 %v1087
  %v1089 = vpop.xlane.xlu0 %1088
  %v1090 = vsel %vm1035, %v1073, 0.0
  %1091 = vadd.xlane.f32.xlu0 %v1090
  %v1092 = vpop.xlane.xlu0 %1091
  %v1093 = vsel %vm1035, %v1075, 0.0
  %1094 = vadd.xlane.f32.xlu0 %v1093
  %v1095 = vpop.xlane.xlu0 %1094
  %v1096 = vsel %vm1035, %v1077, 0.0
  %1097 = vadd.xlane.f32.xlu0 %v1096
  %v1098 = vpop.xlane.xlu0 %1097
  %v1099 = vsel %vm1035, %v1079, 0.0
  %1100 = vadd.xlane.f32.xlu0 %v1099
  %v1101 = vpop.xlane.xlu0 %1100
  %v1102 = vsel %vm1035, %v1081, 0.0
  %1103 = vadd.xlane.f32.xlu0 %v1102
  %v1104 = vpop.xlane.xlu0 %1103
  %v1105 = vsel %vm1035, %v1083, 0.0
  %1106 = vadd.xlane.f32.xlu0 %v1105
  %v1107 = vpop.xlane.xlu0 %1106
  %v1108 = vlog2.pop %v1086
  %v1109 = vmul.f32 %v1108, 0.6931472
  %v1110 = vlog2.pop %v1089
  %v1111 = vmul.f32 %v1110, 0.6931472
  %v1112 = vlog2.pop %v1092
  %v1113 = vmul.f32 %v1112, 0.6931472
  %v1114 = vlog2.pop %v1095
  %v1115 = vmul.f32 %v1114, 0.6931472
  %v1116 = vlog2.pop %v1098
  %v1117 = vmul.f32 %v1116, 0.6931472
  %v1118 = vlog2.pop %v1101
  %v1119 = vmul.f32 %v1118, 0.6931472
  %v1120 = vlog2.pop %v1104
  %v1121 = vmul.f32 %v1120, 0.6931472
  %v1122 = vlog2.pop %v1107
  %v1123 = vmul.f32 %v1122, 0.6931472
  %v1124 = vsub.f32 %v1060, %v1109
  %v1125 = vsub.f32 %v1061, %v1111
  %v1126 = vsub.f32 %v1062, %v1113
  %v1127 = vsub.f32 %v1063, %v1115
  %v1128 = vsub.f32 %v1064, %v1117
  %v1129 = vsub.f32 %v1065, %v1119
  %v1130 = vsub.f32 %v1066, %v1121
  %v1131 = vsub.f32 %v1067, %v1123
  %1132 = vst.msk [vmem:[%s6] sm:$0xff] %vm1035, %v1124
  %1133 = vst.msk [vmem:[%s6 + $0x8] sm:$0xff] %vm1035, %v1125
  %1134 = vst.msk [vmem:[%s6 + $0x10] sm:$0xff] %vm1035, %v1126
  %1135 = vst.msk [vmem:[%s6 + $0x18] sm:$0xff] %vm1035, %v1127
  %1136 = vst.msk [vmem:[%s6 + $0x20] sm:$0xff] %vm1035, %v1128
  %1137 = vst.msk [vmem:[%s6 + $0x28] sm:$0xff] %vm1035, %v1129
  %1138 = vst.msk [vmem:[%s6 + $0x30] sm:$0xff] %vm1035, %v1130
  %1139 = vst.msk [vmem:[%s6 + $0x38] sm:$0xff] %vm1035, %v1131
  // Predicated region
  $region26: #{tpu_custom_call.1} parent=0 // pred_check
    _
  $region27: #{tpu_custom_call.1} parent=0 // pred_check_branch
    %1141 = sbr.rel (0) target = $region29
  $region28: #{tpu_custom_call.1} parent=0 // pred_region
    _
  $region29: #{tpu_custom_call.1} parent=0 // pred_fallthru
    _
  // Predicated region
  $region30: #{tpu_custom_call.1} parent=0 // pred_check
    _
  $region31: #{tpu_custom_call.1} parent=0 // pred_check_branch
    %1143 = sbr.rel (0) target = $region33
  $region32: #{tpu_custom_call.1} parent=0 // pred_region
    _
  $region33: #{tpu_custom_call.1} parent=0 // pred_fallthru
    _

</llo_original>
